<compile_context>
chip_gen: v6e
topology: v6e:2x2x1
jax: 0.10.0
libtpu: 0.0.40
codegen_flags: <defaults>
</compile_context>

<pallas_src>
import math
import functools

import jax
import jax.numpy as jnp
from jax import lax
from jax.experimental import pallas as pl
from jax.experimental.pallas import tpu as pltpu


def _mha_kernel(x_ref, wq_ref, wk_ref, wv_ref, wo_ref, bo_ref,
                o_ref, acc_ref, *, head_dim):
    # x_ref  : (1, T, d_in)       current batch element
    # wq/wk/wv_ref : (1, d_in, hd)  per-head projection slice (pre-transposed)
    # wo_ref : (1, hd, d_out)     per-head slice of out_proj.weight^T
    # bo_ref : (1, d_out)         out_proj.bias
    # o_ref  : (1, T, d_out)      output block (resident across the head axis)
    # acc_ref: (T, d_out) f32     VMEM accumulator across heads
    h = pl.program_id(1)
    T = x_ref.shape[1]

    x = x_ref[0]                                               # (T, d_in)
    scale = 1.0 / math.sqrt(float(head_dim))

    # Per-head QKV projections (MXU). Scale fused into Q.
    q = jnp.dot(x, wq_ref[0], preferred_element_type=jnp.float32) * scale  # (T, hd)
    k = jnp.dot(x, wk_ref[0], preferred_element_type=jnp.float32)          # (T, hd)
    v = jnp.dot(x, wv_ref[0], preferred_element_type=jnp.float32)          # (T, hd)

    # Scores in NT form: contract last dims, no explicit transpose of K.
    scores = lax.dot_general(q, k, (((1,), (1,)), ((), ())),
                             preferred_element_type=jnp.float32)           # (T, T)

    # Causal mask generated on the VPU (col > row => masked).
    row = lax.broadcasted_iota(jnp.int32, (T, T), 0)
    col = lax.broadcasted_iota(jnp.int32, (T, T), 1)
    scores = jnp.where(col > row, jnp.float32(-1e30), scores)

    # Numerically stable softmax; reciprocal goes to the EUP slot.
    m = jnp.max(scores, axis=-1, keepdims=True)
    e = jnp.exp(scores - m)
    denom = jnp.sum(e, axis=-1, keepdims=True)
    attn = e * pl.reciprocal(denom)
    # dropout: eval-mode identity

    ctx = jnp.dot(attn, v, preferred_element_type=jnp.float32)             # (T, hd)
    # This head's contribution to the output projection (lane-dense d_out).
    contrib = jnp.dot(ctx, wo_ref[0], preferred_element_type=jnp.float32)  # (T, d_out)

    @pl.when(h == 0)
    def _():
        acc_ref[...] = jnp.zeros_like(acc_ref)

    acc_ref[...] += contrib

    @pl.when(h == pl.num_programs(1) - 1)
    def _():
        o_ref[0] = (acc_ref[...] + bo_ref[...]).astype(o_ref.dtype)


def multi_head_attention(x, wq, wk, wv, wo, bo, *, num_heads):
    """x: (B, T, d_in) -> (B, T, d_out).  Grid = (batch, heads)."""
    B, T, d_in = x.shape
    d_out = wq.shape[0]
    assert d_out % num_heads == 0
    hd = d_out // num_heads

    # One-time host-side relayout (outside the kernel):
    #   QKV: [out, in] -> [in, out] -> per-head [H, in, hd]
    #   out_proj: [out, in_ctx] -> [in_ctx, out] -> [H, hd, out]
    def split_heads_in(w):                      # (d_out, d_in) -> (H, d_in, hd)
        return jnp.transpose(w.T.reshape(d_in, num_heads, hd), (1, 0, 2))

    wq_h = split_heads_in(wq)
    wk_h = split_heads_in(wk)
    wv_h = split_heads_in(wv)
    wo_h = wo.T.reshape(num_heads, hd, d_out)   # (H, hd, d_out)
    bo2d = bo.reshape(1, d_out)

    kernel = functools.partial(_mha_kernel, head_dim=hd)

    return pl.pallas_call(
        kernel,
        out_shape=jax.ShapeDtypeStruct((B, T, d_out), x.dtype),
        grid_spec=pltpu.PrefetchScalarGridSpec(
            num_scalar_prefetch=0,
            grid=(B, num_heads),
            in_specs=[
                pl.BlockSpec((1, T, d_in),   lambda b, h: (b, 0, 0)),   # x
                pl.BlockSpec((1, d_in, hd),  lambda b, h: (h, 0, 0)),   # W_query (per head)
                pl.BlockSpec((1, d_in, hd),  lambda b, h: (h, 0, 0)),   # W_key
                pl.BlockSpec((1, d_in, hd),  lambda b, h: (h, 0, 0)),   # W_value
                pl.BlockSpec((1, hd, d_out), lambda b, h: (h, 0, 0)),   # out_proj.weight^T (per head)
                pl.BlockSpec((1, d_out),     lambda b, h: (0, 0)),      # out_proj.bias
            ],
            out_specs=pl.BlockSpec((1, T, d_out), lambda b, h: (b, 0, 0)),
            scratch_shapes=[pltpu.VMEM((T, d_out), jnp.float32)],
        ),
        compiler_params=pltpu.CompilerParams(
            dimension_semantics=("parallel", "arbitrary")),
    )(x, wq_h, wk_h, wv_h, wo_h, bo2d)


def _reference(x, wq, wk, wv, wo, bo, num_heads):
    """Pure-JAX reference replicating the PyTorch forward (eval mode)."""
    B, T, d_in = x.shape
    d_out = wq.shape[0]
    hd = d_out // num_heads
    q = jnp.einsum("btd,od->bto", x, wq).reshape(B, T, num_heads, hd).transpose(0, 2, 1, 3)
    k = jnp.einsum("btd,od->bto", x, wk).reshape(B, T, num_heads, hd).transpose(0, 2, 1, 3)
    v = jnp.einsum("btd,od->bto", x, wv).reshape(B, T, num_heads, hd).transpose(0, 2, 1, 3)
    scores = jnp.einsum("bhqd,bhkd->bhqk", q, k)
    mask = jnp.triu(jnp.ones((T, T), bool), k=1)
    scores = jnp.where(mask[None, None], -jnp.inf, scores)
    w = jax.nn.softmax(scores / math.sqrt(hd), axis=-1)
    ctx = jnp.einsum("bhqk,bhkd->bhqd", w, v).transpose(0, 2, 1, 3).reshape(B, T, d_out)
    return jnp.einsum("bto,po->btp", ctx, wo) + bo


if __name__ == "__main__":
    # Module hyperparameters (small, consistent with the forward pass)
    B, T = 2, 8
    d_in, d_out = 32, 32
    num_heads = 4
    # dropout = 0.0 (eval-mode identity)

    key = jax.random.PRNGKey(0)
    kx, kq, kk, kv, ko, kb = jax.random.split(key, 6)

    x = jax.random.normal(kx, (B, T, d_in), dtype=jnp.float32)

    # Deterministic "Linear" parameter init (uniform, PyTorch-like bound)
    bound_in = 1.0 / math.sqrt(d_in)
    bound_out = 1.0 / math.sqrt(d_out)
    wq = jax.random.uniform(kq, (d_out, d_in), jnp.float32, -bound_in, bound_in)
    wk = jax.random.uniform(kk, (d_out, d_in), jnp.float32, -bound_in, bound_in)
    wv = jax.random.uniform(kv, (d_out, d_in), jnp.float32, -bound_in, bound_in)
    wo = jax.random.uniform(ko, (d_out, d_out), jnp.float32, -bound_out, bound_out)
    bo = jax.random.uniform(kb, (d_out,), jnp.float32, -bound_out, bound_out)

    out = multi_head_attention(x, wq, wk, wv, wo, bo, num_heads=num_heads)
    out = jax.block_until_ready(out)

    ref = _reference(x, wq, wk, wv, wo, bo, num_heads)
    assert out.shape == (B, T, d_out)
    assert jnp.allclose(out, ref, atol=1e-4, rtol=1e-4), "mismatch vs reference"

    print("KERNEL_OK")
</pallas_src>

<mosaic_0001>
module attributes {stable_mosaic.version = 11 : i64} {
  func.func @_mha_kernel(%arg0: i32, %arg1: i32, %arg2: memref<1x8x32xf32, #tpu.memory_space<vmem>>, %arg3: memref<1x32x8xf32, #tpu.memory_space<vmem>>, %arg4: memref<1x32x8xf32, #tpu.memory_space<vmem>>, %arg5: memref<1x32x8xf32, #tpu.memory_space<vmem>>, %arg6: memref<1x8x32xf32, #tpu.memory_space<vmem>>, %arg7: memref<1x32xf32, #tpu.memory_space<vmem>>, %arg8: memref<1x8x32xf32, #tpu.memory_space<vmem>>, %arg9: memref<8x32xf32, #tpu.memory_space<vmem>>) attributes {dimension_semantics = [#tpu.dimension_semantics<parallel>, #tpu.dimension_semantics<arbitrary>], iteration_bounds = array<i64: 2, 4>, scalar_prefetch = 0 : i64, scratch_operands = 1 : i64, tpu.core_type = #tpu.core_type<tc>, window_params = [{transform_indices = @transform_0, window_bounds = array<i64: 1, 8, 32>}, {transform_indices = @transform_1, window_bounds = array<i64: 1, 32, 8>}, {transform_indices = @transform_2, window_bounds = array<i64: 1, 32, 8>}, {transform_indices = @transform_3, window_bounds = array<i64: 1, 32, 8>}, {transform_indices = @transform_4, window_bounds = array<i64: 1, 8, 32>}, {pipeline_mode = #tpu.pipeline_mode<synchronous>, transform_indices = @transform_5, window_bounds = array<i64: 1, 32>}, {transform_indices = @transform_6, window_bounds = array<i64: 1, 8, 32>}]} {
    %c0 = arith.constant 0 : index
    %c0_0 = arith.constant 0 : index
    %c0_1 = arith.constant 0 : index
    %0 = vector.load %arg2[%c0, %c0_0, %c0_1] : memref<1x8x32xf32, #tpu.memory_space<vmem>>, vector<1x8x32xf32>
    %1 = vector.shape_cast %0 : vector<1x8x32xf32> to vector<8x32xf32>
    %c0_2 = arith.constant 0 : index
    %c0_3 = arith.constant 0 : index
    %c0_4 = arith.constant 0 : index
    %2 = vector.load %arg3[%c0_2, %c0_3, %c0_4] : memref<1x32x8xf32, #tpu.memory_space<vmem>>, vector<1x32x8xf32>
    %3 = vector.shape_cast %2 : vector<1x32x8xf32> to vector<32x8xf32>
    %cst = arith.constant dense<0.000000e+00> : vector<8x8xf32>
    %4 = tpu.matmul %1, %3, %cst {dimension_numbers = #tpu.dot_dimension_numbers<[1], [0], [0], [1], [0, 0, 1, 1], [], []>} : vector<8x32xf32>, vector<32x8xf32>, vector<8x8xf32> -> vector<8x8xf32>
    %cst_5 = arith.constant 0.353553385 : f32
    %5 = vector.broadcast %cst_5 : f32 to vector<8x8xf32>
    %6 = arith.mulf %4, %5 : vector<8x8xf32>
    %c0_6 = arith.constant 0 : index
    %c0_7 = arith.constant 0 : index
    %c0_8 = arith.constant 0 : index
    %7 = vector.load %arg4[%c0_6, %c0_7, %c0_8] : memref<1x32x8xf32, #tpu.memory_space<vmem>>, vector<1x32x8xf32>
    %8 = vector.shape_cast %7 : vector<1x32x8xf32> to vector<32x8xf32>
    %cst_9 = arith.constant dense<0.000000e+00> : vector<8x8xf32>
    %9 = tpu.matmul %1, %8, %cst_9 {dimension_numbers = #tpu.dot_dimension_numbers<[1], [0], [0], [1], [0, 0, 1, 1], [], []>} : vector<8x32xf32>, vector<32x8xf32>, vector<8x8xf32> -> vector<8x8xf32>
    %c0_10 = arith.constant 0 : index
    %c0_11 = arith.constant 0 : index
    %c0_12 = arith.constant 0 : index
    %10 = vector.load %arg5[%c0_10, %c0_11, %c0_12] : memref<1x32x8xf32, #tpu.memory_space<vmem>>, vector<1x32x8xf32>
    %11 = vector.shape_cast %10 : vector<1x32x8xf32> to vector<32x8xf32>
    %cst_13 = arith.constant dense<0.000000e+00> : vector<8x8xf32>
    %12 = tpu.matmul %1, %11, %cst_13 {dimension_numbers = #tpu.dot_dimension_numbers<[1], [0], [0], [1], [0, 0, 1, 1], [], []>} : vector<8x32xf32>, vector<32x8xf32>, vector<8x8xf32> -> vector<8x8xf32>
    %cst_14 = arith.constant dense<0.000000e+00> : vector<8x8xf32>
    %13 = tpu.matmul %6, %9, %cst_14 {dimension_numbers = #tpu.dot_dimension_numbers<[1], [1], [0], [0], [0, 0, 1, 0], [], []>} : vector<8x8xf32>, vector<8x8xf32>, vector<8x8xf32> -> vector<8x8xf32>
    %14 = tpu.iota {dimensions = array<i32: 0>} : vector<8x8xi32>
    %15 = tpu.iota {dimensions = array<i32: 1>} : vector<8x8xi32>
    %16 = arith.cmpi sgt, %15, %14 : vector<8x8xi32>
    %cst_15 = arith.constant -1.000000e+30 : f32
    %17 = vector.broadcast %cst_15 : f32 to vector<8x8xf32>
    %18 = arith.select %16, %17, %13 : vector<8x8xi1>, vector<8x8xf32>
    %cst_16 = arith.constant dense<0xFF800000> : vector<8xf32>
    %19 = vector.multi_reduction <maximumf>, %18, %cst_16 [1] : vector<8x8xf32> to vector<8xf32>
    %20 = vector.shape_cast %19 : vector<8xf32> to vector<8x1xf32>
    %21 = vector.broadcast %20 : vector<8x1xf32> to vector<8x8xf32>
    %22 = arith.subf %18, %21 : vector<8x8xf32>
    %23 = math.exp %22 : vector<8x8xf32>
    %cst_17 = arith.constant dense<0.000000e+00> : vector<8xf32>
    %24 = vector.multi_reduction <add>, %23, %cst_17 [1] : vector<8x8xf32> to vector<8xf32>
    %25 = vector.shape_cast %24 : vector<8xf32> to vector<8x1xf32>
    %26 = tpu.reciprocal %25 : vector<8x1xf32> -> vector<8x1xf32>
    %27 = vector.broadcast %26 : vector<8x1xf32> to vector<8x8xf32>
    %28 = arith.mulf %23, %27 : vector<8x8xf32>
    %cst_18 = arith.constant dense<0.000000e+00> : vector<8x8xf32>
    %29 = tpu.matmul %28, %12, %cst_18 {dimension_numbers = #tpu.dot_dimension_numbers<[1], [0], [0], [1], [0, 0, 1, 1], [], []>} : vector<8x8xf32>, vector<8x8xf32>, vector<8x8xf32> -> vector<8x8xf32>
    %c0_19 = arith.constant 0 : index
    %c0_20 = arith.constant 0 : index
    %c0_21 = arith.constant 0 : index
    %30 = vector.load %arg6[%c0_19, %c0_20, %c0_21] : memref<1x8x32xf32, #tpu.memory_space<vmem>>, vector<1x8x32xf32>
    %31 = vector.shape_cast %30 : vector<1x8x32xf32> to vector<8x32xf32>
    %cst_22 = arith.constant dense<0.000000e+00> : vector<8x32xf32>
    %32 = tpu.matmul %29, %31, %cst_22 {dimension_numbers = #tpu.dot_dimension_numbers<[1], [0], [0], [1], [0, 0, 1, 1], [], []>} : vector<8x8xf32>, vector<8x32xf32>, vector<8x32xf32> -> vector<8x32xf32>
    %c0_i32 = arith.constant 0 : i32
    %33 = arith.cmpi eq, %arg1, %c0_i32 : i32
    %34 = arith.extui %33 : i1 to i32
    %c0_i32_23 = arith.constant 0 : i32
    %35 = arith.cmpi ne, %34, %c0_i32_23 : i32
    scf.if %35 {
      %cst_29 = arith.constant 0.000000e+00 : f32
      %42 = vector.broadcast %cst_29 : f32 to vector<8x32xf32>
      %c0_30 = arith.constant 0 : index
      %c0_31 = arith.constant 0 : index
      %43 = vector.load %arg9[%c0_30, %c0_31] : memref<8x32xf32, #tpu.memory_space<vmem>>, vector<8x32xf32>
      tpu.vector_store %arg9[%c0_30, %c0_31], %42 {strides = array<i32>} : memref<8x32xf32, #tpu.memory_space<vmem>>, vector<8x32xf32>,
    } else {
    }
    %c0_24 = arith.constant 0 : index
    %c0_25 = arith.constant 0 : index
    %36 = vector.load %arg9[%c0_24, %c0_25] : memref<8x32xf32, #tpu.memory_space<vmem>>, vector<8x32xf32>
    %37 = arith.addf %36, %32 : vector<8x32xf32>
    %c0_26 = arith.constant 0 : index
    %c0_27 = arith.constant 0 : index
    %38 = vector.load %arg9[%c0_26, %c0_27] : memref<8x32xf32, #tpu.memory_space<vmem>>, vector<8x32xf32>
    tpu.vector_store %arg9[%c0_26, %c0_27], %37 {strides = array<i32>} : memref<8x32xf32, #tpu.memory_space<vmem>>, vector<8x32xf32>,
    %c3_i32 = arith.constant 3 : i32
    %39 = arith.cmpi eq, %arg1, %c3_i32 : i32
    %40 = arith.extui %39 : i1 to i32
    %c0_i32_28 = arith.constant 0 : i32
    %41 = arith.cmpi ne, %40, %c0_i32_28 : i32
    scf.if %41 {
      %c0_29 = arith.constant 0 : index
      %c0_30 = arith.constant 0 : index
      %42 = vector.load %arg9[%c0_29, %c0_30] : memref<8x32xf32, #tpu.memory_space<vmem>>, vector<8x32xf32>
      %c0_31 = arith.constant 0 : index
      %c0_32 = arith.constant 0 : index
      %43 = vector.load %arg7[%c0_31, %c0_32] : memref<1x32xf32, #tpu.memory_space<vmem>>, vector<1x32xf32>
      %44 = vector.broadcast %43 : vector<1x32xf32> to vector<8x32xf32>
      %45 = arith.addf %42, %44 : vector<8x32xf32>
      %c0_33 = arith.constant 0 : index
      %c0_34 = arith.constant 0 : index
      %c0_35 = arith.constant 0 : index
      %46 = vector.load %arg8[%c0_33, %c0_34, %c0_35] : memref<1x8x32xf32, #tpu.memory_space<vmem>>, vector<1x8x32xf32>
      %47 = vector.shape_cast %46 : vector<1x8x32xf32> to vector<8x32xf32>
      %48 = vector.shape_cast %45 : vector<8x32xf32> to vector<1x8x32xf32>
      tpu.vector_store %arg8[%c0_33, %c0_34, %c0_35], %48 {strides = array<i32>} : memref<1x8x32xf32, #tpu.memory_space<vmem>>, vector<1x8x32xf32>,
    } else {
    }
    return
  }
  func.func @transform_0(%arg0: i32, %arg1: i32) -> (i32, i32, i32) {
    %c0_i32 = arith.constant 0 : i32
    %c0_i32_0 = arith.constant 0 : i32
    %c0_i32_1 = arith.constant 0 : i32
    return %arg0, %c0_i32, %c0_i32_0 : i32, i32, i32
  }
  func.func @transform_1(%arg0: i32, %arg1: i32) -> (i32, i32, i32) {
    %c0_i32 = arith.constant 0 : i32
    %c0_i32_0 = arith.constant 0 : i32
    %c0_i32_1 = arith.constant 0 : i32
    return %arg1, %c0_i32, %c0_i32_0 : i32, i32, i32
  }
  func.func @transform_2(%arg0: i32, %arg1: i32) -> (i32, i32, i32) {
    %c0_i32 = arith.constant 0 : i32
    %c0_i32_0 = arith.constant 0 : i32
    %c0_i32_1 = arith.constant 0 : i32
    return %arg1, %c0_i32, %c0_i32_0 : i32, i32, i32
  }
  func.func @transform_3(%arg0: i32, %arg1: i32) -> (i32, i32, i32) {
    %c0_i32 = arith.constant 0 : i32
    %c0_i32_0 = arith.constant 0 : i32
    %c0_i32_1 = arith.constant 0 : i32
    return %arg1, %c0_i32, %c0_i32_0 : i32, i32, i32
  }
  func.func @transform_4(%arg0: i32, %arg1: i32) -> (i32, i32, i32) {
    %c0_i32 = arith.constant 0 : i32
    %c0_i32_0 = arith.constant 0 : i32
    %c0_i32_1 = arith.constant 0 : i32
    return %arg1, %c0_i32, %c0_i32_0 : i32, i32, i32
  }
  func.func @transform_5(%arg0: i32, %arg1: i32) -> (i32, i32) {
    %c0_i32 = arith.constant 0 : i32
    %c0_i32_0 = arith.constant 0 : i32
    %c0_i32_1 = arith.constant 0 : i32
    return %c0_i32, %c0_i32_0 : i32, i32
  }
  func.func @transform_6(%arg0: i32, %arg1: i32) -> (i32, i32, i32) {
    %c0_i32 = arith.constant 0 : i32
    %c0_i32_0 = arith.constant 0 : i32
    %c0_i32_1 = arith.constant 0 : i32
    return %arg0, %c0_i32, %c0_i32_0 : i32, i32, i32
  }
}

</mosaic_0001>

<llo_original>
// kernel: tpu_custom_call.1
$region0: #{tpu_custom_call.1}
  #allocation0 [shape = 'u32[]', space=smem, size = 0x4, offset = 0x4, fixed_abs, tag = 'smem constant byte address 0x4 - core index']
  #allocation1 [shape = 'u32[144,128]{1,0:T(1,128)}', space=vmem, size = 0x12000, scoped, tag = 'internal scratch']
  #allocation2 [shape = 'f32[8,32]{1,0:T(8,128)}', space=vmem, size = 0x1000, scoped, tag = 'scratch operand']
  %s0 = inlined_call_operand.vmem [shape: f32[2,8,32], index: 0, kind: input, shape index: {}]
  %s1 = inlined_call_operand.vmem [shape: f32[4,32,8], index: 1, kind: input, shape index: {}]
  %s2 = inlined_call_operand.vmem [shape: f32[4,32,8], index: 2, kind: input, shape index: {}]
  %s3 = inlined_call_operand.vmem [shape: f32[4,32,8], index: 3, kind: input, shape index: {}]
  %s4 = inlined_call_operand.vmem [shape: f32[4,8,32], index: 4, kind: input, shape index: {}]
  %s5 = inlined_call_operand.vmem [shape: f32[1,32], index: 5, kind: input, shape index: {}]
  %s6 = inlined_call_operand.hbm [shape: f32[2,8,32], index: 6, kind: output, shape index: {}]
  %s7 = sld [smem:[#allocation0]]
  $region65: #{tpu_custom_call.1} parent=0
    _
  %s9 = ssub.s32 1, %s7
  %s10 = scalar_select 0, %s9, %s7
  $region1: #{tpu_custom_call.1} parent=0
    #allocation3 [shape = 'u8[8192]{0}', space=vmem, size = 0x2000, scoped, tag = 'output window, operand 0']
    #allocation4 [shape = 's32[2]{0}', space=sflag, size = 0x8, scoped, tag = 'scoped memory for tpu_custom_call.1']
    %11 = vsyncpa [#allocation4], 0
    %s12 = scalar_lea.sflag [#allocation4], 1
    %13 = vsyncpa %s12, 0
    loop: start=0, step=1, limit=10
    $region2: #{tpu_custom_call.1} parent=1 // loop_pre_header
      _
    $region3: #{tpu_custom_call.1} parent=1 // loop_header
      %s15 = sphi 0, %s19
      %p16 = scmp.ge.s32.totalorder %s15, 10
      %s22 = sphi 0, %s34
      %s23 = sphi 0, %s30
      %s24 = sphi 0, %s22
      %s25 = sphi 0, %s23
      %s26 = sphi 0, %s24
      %s27 = sphi 0, %s25
      %s37 = sphi 0, %s39
      %s40 = sphi 0, %s37
      %s41 = sphi 0, %s40
      %s57 = sphi 0, %s41
      %s63 = sphi 0, %s65
      %s66 = sphi 0, %s63
      %s67 = sphi 0, %s66
      %s83 = sphi 0, %s67
      %s89 = sphi 0, %s91
      %s92 = sphi 0, %s89
      %s93 = sphi 0, %s92
      %s109 = sphi 0, %s93
      %s115 = sphi 0, %s117
      %s118 = sphi 0, %s115
      %s119 = sphi 0, %s118
      %s135 = sphi 0, %s119
      %s141 = sphi 0, %s143
      %s144 = sphi 0, %s141
      %s145 = sphi 0, %s144
      %s161 = sphi 0, %s145
      %s165 = sphi 0, %s165
      %s167 = sphi 0, %s165
      %s168 = sphi 0, %s167
      %s182 = sphi 0, %s168
      %s188 = sphi 0, %s190
      %s191 = sphi 0, %s188
      %s192 = sphi 0, %s191
      %s208 = sphi 0, %s192
    $region4: #{tpu_custom_call.1} parent=1 // loop_header_branch
      %18 = sbr.rel (%p16) target = $region8
    $region5: #{tpu_custom_call.1} parent=1 // loop_body
      %s20 = ssub.s32 %s15, 1
      %s21 = ssub.s32 %s15, 2
      %s28 = sadd.s32 1, %s23
      %p29 = scmp.ge.s32.totalorder %s28, 4
      %s30 = scalar_select %p29, 0, %s28
      %s31 = sadd.s32 1, %s22
      %s32 = scalar_select %p29, %s31, %s22
      %p33 = scmp.ge.s32.totalorder %s32, 2
      %s34 = scalar_select %p33, 0, %s32
      %s35 = ssub.s32 %s22, %s34
      %p36 = scmp.eq.s32.totalorder %s35, 0
      %s38 = sadd.s32 %s37, 1
      %s39 = scalar_select %p36, %s37, %s38
      %p42 = pneg %p36
      %p43 = scmp.eq.s32.totalorder %s15, 7
      %p44 = por %p42, %p43
      %p45 = scmp.ne.s32.totalorder %s37, %s40
      %p46 = scmp.eq.s32.totalorder %s15, 0
      %p47 = por %p45, %p46
      %p48 = scmp.ne.s32.totalorder %s37, %s40
      %p49 = scmp.eq.s32.totalorder %s20, 7
      %p50 = por %p48, %p49
      %p51 = scmp.ne.s32.totalorder %s40, %s41
      %p52 = scmp.eq.s32.totalorder %s20, 0
      %p53 = por %p51, %p52
      %p54 = scmp.ne.s32.totalorder %s40, %s41
      %p55 = scmp.eq.s32.totalorder %s21, 7
      %p56 = por %p54, %p55
      %p58 = scmp.ne.s32.totalorder %s41, %s57
      %p59 = scmp.eq.s32.totalorder %s21, 0
      %p60 = por %p58, %p59
      %s61 = ssub.s32 %s23, %s30
      %p62 = scmp.eq.s32.totalorder %s61, 0
      %s64 = sadd.s32 %s63, 1
      %s65 = scalar_select %p62, %s63, %s64
      %p68 = pneg %p62
      %p69 = scmp.eq.s32.totalorder %s15, 7
      %p70 = por %p68, %p69
      %p71 = scmp.ne.s32.totalorder %s63, %s66
      %p72 = scmp.eq.s32.totalorder %s15, 0
      %p73 = por %p71, %p72
      %p74 = scmp.ne.s32.totalorder %s63, %s66
      %p75 = scmp.eq.s32.totalorder %s20, 7
      %p76 = por %p74, %p75
      %p77 = scmp.ne.s32.totalorder %s66, %s67
      %p78 = scmp.eq.s32.totalorder %s20, 0
      %p79 = por %p77, %p78
      %p80 = scmp.ne.s32.totalorder %s66, %s67
      %p81 = scmp.eq.s32.totalorder %s21, 7
      %p82 = por %p80, %p81
      %p84 = scmp.ne.s32.totalorder %s67, %s83
      %p85 = scmp.eq.s32.totalorder %s21, 0
      %p86 = por %p84, %p85
      %s87 = ssub.s32 %s23, %s30
      %p88 = scmp.eq.s32.totalorder %s87, 0
      %s90 = sadd.s32 %s89, 1
      %s91 = scalar_select %p88, %s89, %s90
      %p94 = pneg %p88
      %p95 = scmp.eq.s32.totalorder %s15, 7
      %p96 = por %p94, %p95
      %p97 = scmp.ne.s32.totalorder %s89, %s92
      %p98 = scmp.eq.s32.totalorder %s15, 0
      %p99 = por %p97, %p98
      %p100 = scmp.ne.s32.totalorder %s89, %s92
      %p101 = scmp.eq.s32.totalorder %s20, 7
      %p102 = por %p100, %p101
      %p103 = scmp.ne.s32.totalorder %s92, %s93
      %p104 = scmp.eq.s32.totalorder %s20, 0
      %p105 = por %p103, %p104
      %p106 = scmp.ne.s32.totalorder %s92, %s93
      %p107 = scmp.eq.s32.totalorder %s21, 7
      %p108 = por %p106, %p107
      %p110 = scmp.ne.s32.totalorder %s93, %s109
      %p111 = scmp.eq.s32.totalorder %s21, 0
      %p112 = por %p110, %p111
      %s113 = ssub.s32 %s23, %s30
      %p114 = scmp.eq.s32.totalorder %s113, 0
      %s116 = sadd.s32 %s115, 1
      %s117 = scalar_select %p114, %s115, %s116
      %p120 = pneg %p114
      %p121 = scmp.eq.s32.totalorder %s15, 7
      %p122 = por %p120, %p121
      %p123 = scmp.ne.s32.totalorder %s115, %s118
      %p124 = scmp.eq.s32.totalorder %s15, 0
      %p125 = por %p123, %p124
      %p126 = scmp.ne.s32.totalorder %s115, %s118
      %p127 = scmp.eq.s32.totalorder %s20, 7
      %p128 = por %p126, %p127
      %p129 = scmp.ne.s32.totalorder %s118, %s119
      %p130 = scmp.eq.s32.totalorder %s20, 0
      %p131 = por %p129, %p130
      %p132 = scmp.ne.s32.totalorder %s118, %s119
      %p133 = scmp.eq.s32.totalorder %s21, 7
      %p134 = por %p132, %p133
      %p136 = scmp.ne.s32.totalorder %s119, %s135
      %p137 = scmp.eq.s32.totalorder %s21, 0
      %p138 = por %p136, %p137
      %s139 = ssub.s32 %s23, %s30
      %p140 = scmp.eq.s32.totalorder %s139, 0
      %s142 = sadd.s32 %s141, 1
      %s143 = scalar_select %p140, %s141, %s142
      %p146 = pneg %p140
      %p147 = scmp.eq.s32.totalorder %s15, 7
      %p148 = por %p146, %p147
      %p149 = scmp.ne.s32.totalorder %s141, %s144
      %p150 = scmp.eq.s32.totalorder %s15, 0
      %p151 = por %p149, %p150
      %p152 = scmp.ne.s32.totalorder %s141, %s144
      %p153 = scmp.eq.s32.totalorder %s20, 7
      %p154 = por %p152, %p153
      %p155 = scmp.ne.s32.totalorder %s144, %s145
      %p156 = scmp.eq.s32.totalorder %s20, 0
      %p157 = por %p155, %p156
      %p158 = scmp.ne.s32.totalorder %s144, %s145
      %p159 = scmp.eq.s32.totalorder %s21, 7
      %p160 = por %p158, %p159
      %p162 = scmp.ne.s32.totalorder %s145, %s161
      %p163 = scmp.eq.s32.totalorder %s21, 0
      %p164 = por %p162, %p163
      %s166 = sadd.s32 %s165, 1
      %p169 = scmp.eq.s32.totalorder %s15, 7
      %p170 = scmp.ne.s32.totalorder %s165, %s167
      %p171 = scmp.eq.s32.totalorder %s15, 0
      %p172 = por %p170, %p171
      %p173 = scmp.ne.s32.totalorder %s165, %s167
      %p174 = scmp.eq.s32.totalorder %s20, 7
      %p175 = por %p173, %p174
      %p176 = scmp.ne.s32.totalorder %s167, %s168
      %p177 = scmp.eq.s32.totalorder %s20, 0
      %p178 = por %p176, %p177
      %p179 = scmp.ne.s32.totalorder %s167, %s168
      %p180 = scmp.eq.s32.totalorder %s21, 7
      %p181 = por %p179, %p180
      %p183 = scmp.ne.s32.totalorder %s168, %s182
      %p184 = scmp.eq.s32.totalorder %s21, 0
      %p185 = por %p183, %p184
      %s186 = ssub.s32 %s22, %s34
      %p187 = scmp.eq.s32.totalorder %s186, 0
      %s189 = sadd.s32 %s188, 1
      %s190 = scalar_select %p187, %s188, %s189
      %p193 = pneg %p187
      %p194 = scmp.eq.s32.totalorder %s15, 7
      %p195 = por %p193, %p194
      %p196 = scmp.ne.s32.totalorder %s188, %s191
      %p197 = scmp.eq.s32.totalorder %s15, 0
      %p198 = por %p196, %p197
      %p199 = scmp.ne.s32.totalorder %s188, %s191
      %p200 = scmp.eq.s32.totalorder %s20, 7
      %p201 = por %p199, %p200
      %p202 = scmp.ne.s32.totalorder %s191, %s192
      %p203 = scmp.eq.s32.totalorder %s20, 0
      %p204 = por %p202, %p203
      %p205 = scmp.ne.s32.totalorder %s191, %s192
      %p206 = scmp.eq.s32.totalorder %s21, 7
      %p207 = por %p205, %p206
      %p209 = scmp.ne.s32.totalorder %s192, %s208
      %p210 = scmp.eq.s32.totalorder %s21, 0
      %p211 = por %p209, %p210
      %p212 = scmp.le.s32.totalorder 1, %s15
      %p213 = scmp.lt.s32.totalorder %s15, 9
      %p214 = pnand %p212, %p213
      %p215 = pneg %p214
      // Predicated region
      $region9: #{tpu_custom_call.1} parent=5 // pred_check
        _
      $region10: #{tpu_custom_call.1} parent=5 // pred_check_branch
        %217 = sbr.rel (%p214) target = $region12
      $region11: #{tpu_custom_call.1} parent=5 // pred_region
        %s218 = ssub.s32 %s15, 1
        // Predicated region
        $region13: #{tpu_custom_call.1} parent=11 // pred_check
          %p219 = pneg %p178
        $region14: #{tpu_custom_call.1} parent=11 // pred_check_branch
          %221 = sbr.rel (%p219) target = $region16
        $region15: #{tpu_custom_call.1} parent=11 // pred_region
          _
        $region16: #{tpu_custom_call.1} parent=11 // pred_fallthru
          _
      $region12: #{tpu_custom_call.1} parent=5 // pred_fallthru
        _
      %p222 = scmp.lt.s32.totalorder %s15, 8
      // Predicated region
      $region17: #{tpu_custom_call.1} parent=5 // pred_check
        %p223 = pneg %p222
      $region18: #{tpu_custom_call.1} parent=5 // pred_check_branch
        %225 = sbr.rel (%p223) target = $region20
      $region19: #{tpu_custom_call.1} parent=5 // pred_region
        // Predicated region
        $region21: #{tpu_custom_call.1} parent=19 // pred_check
          %p226 = pneg %p47
        $region22: #{tpu_custom_call.1} parent=19 // pred_check_branch
          %228 = sbr.rel (%p226) target = $region24
        $region23: #{tpu_custom_call.1} parent=19 // pred_region
          %p229 = scmp.lt.s32.totalorder %s22, 1
          %s230 = scalar_select %p229, %s22, 1
          %s231 = smul.addr %s230, 8
          %s232 = scalar_lea.vmem %s0, %s231
        $region24: #{tpu_custom_call.1} parent=19 // pred_fallthru
          _
        // Predicated region
        $region25: #{tpu_custom_call.1} parent=19 // pred_check
          %p233 = pneg %p73
        $region26: #{tpu_custom_call.1} parent=19 // pred_check_branch
          %235 = sbr.rel (%p233) target = $region28
        $region27: #{tpu_custom_call.1} parent=19 // pred_region
          %p236 = scmp.lt.s32.totalorder %s23, 3
          %s237 = scalar_select %p236, %s23, 3
          %s238 = smul.addr %s237, 4
          %s239 = smul.addr %s238, 8
          %s240 = scalar_lea.vmem %s1, %s239
        $region28: #{tpu_custom_call.1} parent=19 // pred_fallthru
          _
        // Predicated region
        $region29: #{tpu_custom_call.1} parent=19 // pred_check
          %p241 = pneg %p99
        $region30: #{tpu_custom_call.1} parent=19 // pred_check_branch
          %243 = sbr.rel (%p241) target = $region32
        $region31: #{tpu_custom_call.1} parent=19 // pred_region
          %p244 = scmp.lt.s32.totalorder %s23, 3
          %s245 = scalar_select %p244, %s23, 3
          %s246 = smul.addr %s245, 4
          %s247 = smul.addr %s246, 8
          %s248 = scalar_lea.vmem %s2, %s247
        $region32: #{tpu_custom_call.1} parent=19 // pred_fallthru
          _
        // Predicated region
        $region33: #{tpu_custom_call.1} parent=19 // pred_check
          %p249 = pneg %p125
        $region34: #{tpu_custom_call.1} parent=19 // pred_check_branch
          %251 = sbr.rel (%p249) target = $region36
        $region35: #{tpu_custom_call.1} parent=19 // pred_region
          %p252 = scmp.lt.s32.totalorder %s23, 3
          %s253 = scalar_select %p252, %s23, 3
          %s254 = smul.addr %s253, 4
          %s255 = smul.addr %s254, 8
          %s256 = scalar_lea.vmem %s3, %s255
        $region36: #{tpu_custom_call.1} parent=19 // pred_fallthru
          _
        // Predicated region
        $region37: #{tpu_custom_call.1} parent=19 // pred_check
          %p257 = pneg %p151
        $region38: #{tpu_custom_call.1} parent=19 // pred_check_branch
          %259 = sbr.rel (%p257) target = $region40
        $region39: #{tpu_custom_call.1} parent=19 // pred_region
          %p260 = scmp.lt.s32.totalorder %s23, 3
          %s261 = scalar_select %p260, %s23, 3
          %s262 = smul.addr %s261, 8
          %s263 = scalar_lea.vmem %s4, %s262
        $region40: #{tpu_custom_call.1} parent=19 // pred_fallthru
          _
      $region20: #{tpu_custom_call.1} parent=5 // pred_fallthru
        _
      %p264 = scmp.le.s32.totalorder 1, %s15
      %p265 = scmp.lt.s32.totalorder %s15, 9
      %p266 = pnand %p264, %p265
      %p267 = pneg %p266
      // Predicated region
      $region41: #{tpu_custom_call.1} parent=5 // pred_check
        _
      $region42: #{tpu_custom_call.1} parent=5 // pred_check_branch
        %269 = sbr.rel (%p266) target = $region44
      $region43: #{tpu_custom_call.1} parent=5 // pred_region
        %s270 = ssub.s32 %s15, 1
        %p271 = scmp.lt.s32.totalorder %s24, 1
        %s272 = scalar_select %p271, %s24, 1
        %s273 = smul.addr %s272, 8
        %s274 = scalar_lea.vmem %s0, %s273
        %p275 = pneg %p53
        %p276 = pneg %p50
        %p277 = scmp.lt.s32.totalorder %s25, 3
        %s278 = scalar_select %p277, %s25, 3
        %s279 = smul.addr %s278, 4
        %s280 = smul.addr %s279, 8
        %s281 = scalar_lea.vmem %s1, %s280
        %p282 = pneg %p79
        %p283 = pneg %p76
        %p284 = scmp.lt.s32.totalorder %s25, 3
        %s285 = scalar_select %p284, %s25, 3
        %s286 = smul.addr %s285, 4
        %s287 = smul.addr %s286, 8
        %s288 = scalar_lea.vmem %s2, %s287
        %p289 = pneg %p105
        %p290 = pneg %p102
        %p291 = scmp.lt.s32.totalorder %s25, 3
        %s292 = scalar_select %p291, %s25, 3
        %s293 = smul.addr %s292, 4
        %s294 = smul.addr %s293, 8
        %s295 = scalar_lea.vmem %s3, %s294
        %p296 = pneg %p131
        %p297 = pneg %p128
        %p298 = scmp.lt.s32.totalorder %s25, 3
        %s299 = scalar_select %p298, %s25, 3
        %s300 = smul.addr %s299, 8
        %s301 = scalar_lea.vmem %s4, %s300
        %p302 = pneg %p157
        %p303 = pneg %p154
        %p304 = pneg %p178
        %p305 = pneg %p175
        %p306 = pneg %p204
        %p307 = pneg %p201
        %s308 = sand.u32 %s191, 1
        %s309 = scalar_lea.sflag [#allocation4], %s308
        %s310 = sand.u32 %s191, 1
        %s311 = smul.addr %s310, 8
        %s312 = scalar_lea.vmem [#allocation3], %s311
        %p313 = scmp.lt.s32.totalorder %s24, 1
        %s314 = scalar_select %p313, %s24, 1
        %s315 = smul.addr %s314, 8
        %s316 = scalar_lea.vmem %s0, %s315
        %p317 = scmp.lt.s32.totalorder %s25, 3
        %s318 = scalar_select %p317, %s25, 3
        %s319 = smul.addr %s318, 4
        %s320 = smul.addr %s319, 8
        %s321 = scalar_lea.vmem %s1, %s320
        %p322 = scmp.lt.s32.totalorder %s25, 3
        %s323 = scalar_select %p322, %s25, 3
        %s324 = smul.addr %s323, 4
        %s325 = smul.addr %s324, 8
        %s326 = scalar_lea.vmem %s2, %s325
        %p327 = scmp.lt.s32.totalorder %s25, 3
        %s328 = scalar_select %p327, %s25, 3
        %s329 = smul.addr %s328, 4
        %s330 = smul.addr %s329, 8
        %s331 = scalar_lea.vmem %s3, %s330
        %p332 = scmp.lt.s32.totalorder %s25, 3
        %s333 = scalar_select %p332, %s25, 3
        %s334 = smul.addr %s333, 8
        %s335 = scalar_lea.vmem %s4, %s334
        %v336 = vld [vmem:[%s316] sm:$0xff]
        %v337 = vld [vmem:[%s321] sm:$0xff]
        %v338 = vld [vmem:[%s321 + $0x8] sm:$0xff]
        %v339 = vld [vmem:[%s321 + $0x10] sm:$0xff]
        %v340 = vld [vmem:[%s321 + $0x18] sm:$0xff]
        %vm341 = vcmask 261120
        %v343 = vsel %vm341, %v336, 0
        %345 = vmatprep.subr.mxu0 0.0
        %346 = vmatpush1.msra.mxu0 0.0
        %347 = vmatprep.subr.mxu0 0.0
        %348 = vmatpush1.msra.mxu0 0.0
        %349 = vmatprep.subr.mxu0 0.0
        %350 = vmatpush1.msra.mxu0 0.0
        %351 = vmatprep.subr.mxu0 0.0
        %352 = vmatpush1.msra.mxu0 0.0
        %353 = vmatprep.subr.mxu0 0.0
        %354 = vmatpush1.msra.mxu0 0.0
        %355 = vmatprep.subr.mxu0 0.0
        %356 = vmatpush1.msra.mxu0 0.0
        %357 = vmatprep.subr.mxu0 0.0
        %358 = vmatpush1.msra.mxu0 0.0
        %359 = vmatprep.subr.mxu0 0.0
        %360 = vmatpush1.msra.mxu0 0.0
        %361 = vmatprep.subr.mxu0 0.0
        %362 = vmatpush1.msra.mxu0 0.0
        %363 = vmatprep.subr.mxu0 0.0
        %364 = vmatpush1.msra.mxu0 0.0
        %365 = vmatprep.subr.mxu0 0.0
        %366 = vmatpush1.msra.mxu0 0.0
        %367 = vmatprep.subr.mxu0 0.0
        %368 = vmatpush1.msra.mxu0 0.0
        %369 = vmatprep.subr.mxu0 0.0
        %370 = vmatpush1.msra.mxu0 %v340
        %371 = vmatprep.subr.mxu0 0.0
        %372 = vmatpush1.msra.mxu0 %v339
        %373 = vmatprep.subr.mxu0 0.0
        %374 = vmatpush1.msra.mxu0 %v338
        %375 = vmatprep.subr.mxu0 0.0
        %376 = vmatpush1.msra.mxu0 %v337
        %377 = vmatprep.subr.mxu0 0.0
        %378 = vmatpush2.msra.mxu0 0.0
        %379 = vmatprep.subr.mxu0 0.0
        %380 = vmatpush2.msra.mxu0 0.0
        %381 = vmatprep.subr.mxu0 0.0
        %382 = vmatpush2.msra.mxu0 0.0
        %383 = vmatprep.subr.mxu0 0.0
        %384 = vmatpush2.msra.mxu0 0.0
        %385 = vmatprep.subr.mxu0 0.0
        %386 = vmatpush2.msra.mxu0 0.0
        %387 = vmatprep.subr.mxu0 0.0
        %388 = vmatpush2.msra.mxu0 0.0
        %389 = vmatprep.subr.mxu0 0.0
        %390 = vmatpush2.msra.mxu0 0.0
        %391 = vmatprep.subr.mxu0 0.0
        %392 = vmatpush2.msra.mxu0 0.0
        %393 = vmatprep.subr.mxu0 0.0
        %394 = vmatpush2.msra.mxu0 0.0
        %395 = vmatprep.subr.mxu0 0.0
        %396 = vmatpush2.msra.mxu0 0.0
        %397 = vmatprep.subr.mxu0 0.0
        %398 = vmatpush2.msra.mxu0 0.0
        %399 = vmatprep.subr.mxu0 0.0
        %400 = vmatpush2.msra.mxu0 0.0
        %401 = vmatprep.subr.mxu0 0.0
        %402 = vmatpush2.msra.mxu0 0.0
        %403 = vmatprep.subr.mxu0 0.0
        %404 = vmatpush2.msra.mxu0 0.0
        %405 = vmatprep.subr.mxu0 0.0
        %406 = vmatpush2.msra.mxu0 0.0
        %407 = vmatprep.subr.mxu0 0.0
        %408 = vmatpush2.msra.mxu0 0.0
        %409 = vmatprep.mubr.f32.mxu0 0.0
        %410 = vmatmul.mubr.f32.gmra.mxu0 %v343
        %v411 = vpop.f32.mrf.mxu0
        %v412 = vadd.f32 0.0, %v411
        %v413 = vpop.f32.mrf.mxu0
        %414 = vdwg.mxu0
        %v415 = vmul.f32 %v412, 0.35355338
        %v416 = vld [vmem:[%s326] sm:$0xff]
        %v417 = vld [vmem:[%s326 + $0x8] sm:$0xff]
        %v418 = vld [vmem:[%s326 + $0x10] sm:$0xff]
        %v419 = vld [vmem:[%s326 + $0x18] sm:$0xff]
        %420 = vmatprep.subr.mxu0 0.0
        %421 = vmatpush1.msra.mxu0 0.0
        %422 = vmatprep.subr.mxu0 0.0
        %423 = vmatpush1.msra.mxu0 0.0
        %424 = vmatprep.subr.mxu0 0.0
        %425 = vmatpush1.msra.mxu0 0.0
        %426 = vmatprep.subr.mxu0 0.0
        %427 = vmatpush1.msra.mxu0 0.0
        %428 = vmatprep.subr.mxu0 0.0
        %429 = vmatpush1.msra.mxu0 0.0
        %430 = vmatprep.subr.mxu0 0.0
        %431 = vmatpush1.msra.mxu0 0.0
        %432 = vmatprep.subr.mxu0 0.0
        %433 = vmatpush1.msra.mxu0 0.0
        %434 = vmatprep.subr.mxu0 0.0
        %435 = vmatpush1.msra.mxu0 0.0
        %436 = vmatprep.subr.mxu0 0.0
        %437 = vmatpush1.msra.mxu0 0.0
        %438 = vmatprep.subr.mxu0 0.0
        %439 = vmatpush1.msra.mxu0 0.0
        %440 = vmatprep.subr.mxu0 0.0
        %441 = vmatpush1.msra.mxu0 0.0
        %442 = vmatprep.subr.mxu0 0.0
        %443 = vmatpush1.msra.mxu0 0.0
        %444 = vmatprep.subr.mxu0 0.0
        %445 = vmatpush1.msra.mxu0 %v419
        %446 = vmatprep.subr.mxu0 0.0
        %447 = vmatpush1.msra.mxu0 %v418
        %448 = vmatprep.subr.mxu0 0.0
        %449 = vmatpush1.msra.mxu0 %v417
        %450 = vmatprep.subr.mxu0 0.0
        %451 = vmatpush1.msra.mxu0 %v416
        %452 = vmatprep.subr.mxu0 0.0
        %453 = vmatpush2.msra.mxu0 0.0
        %454 = vmatprep.subr.mxu0 0.0
        %455 = vmatpush2.msra.mxu0 0.0
        %456 = vmatprep.subr.mxu0 0.0
        %457 = vmatpush2.msra.mxu0 0.0
        %458 = vmatprep.subr.mxu0 0.0
        %459 = vmatpush2.msra.mxu0 0.0
        %460 = vmatprep.subr.mxu0 0.0
        %461 = vmatpush2.msra.mxu0 0.0
        %462 = vmatprep.subr.mxu0 0.0
        %463 = vmatpush2.msra.mxu0 0.0
        %464 = vmatprep.subr.mxu0 0.0
        %465 = vmatpush2.msra.mxu0 0.0
        %466 = vmatprep.subr.mxu0 0.0
        %467 = vmatpush2.msra.mxu0 0.0
        %468 = vmatprep.subr.mxu0 0.0
        %469 = vmatpush2.msra.mxu0 0.0
        %470 = vmatprep.subr.mxu0 0.0
        %471 = vmatpush2.msra.mxu0 0.0
        %472 = vmatprep.subr.mxu0 0.0
        %473 = vmatpush2.msra.mxu0 0.0
        %474 = vmatprep.subr.mxu0 0.0
        %475 = vmatpush2.msra.mxu0 0.0
        %476 = vmatprep.subr.mxu0 0.0
        %477 = vmatpush2.msra.mxu0 0.0
        %478 = vmatprep.subr.mxu0 0.0
        %479 = vmatpush2.msra.mxu0 0.0
        %480 = vmatprep.subr.mxu0 0.0
        %481 = vmatpush2.msra.mxu0 0.0
        %482 = vmatprep.subr.mxu0 0.0
        %483 = vmatpush2.msra.mxu0 0.0
        %484 = vmatprep.mubr.f32.mxu0 0.0
        %485 = vmatmul.mubr.f32.gmra.mxu0 %v343
        %v486 = vpop.f32.mrf.mxu0
        %v487 = vadd.f32 0.0, %v486
        %v488 = vpop.f32.mrf.mxu0
        %489 = vdwg.mxu0
        %v490 = vld [vmem:[%s331] sm:$0xff]
        %v491 = vld [vmem:[%s331 + $0x8] sm:$0xff]
        %v492 = vld [vmem:[%s331 + $0x10] sm:$0xff]
        %v493 = vld [vmem:[%s331 + $0x18] sm:$0xff]
        %494 = vmatprep.subr.mxu0 0.0
        %495 = vmatpush1.msra.mxu0 0.0
        %496 = vmatprep.subr.mxu0 0.0
        %497 = vmatpush1.msra.mxu0 0.0
        %498 = vmatprep.subr.mxu0 0.0
        %499 = vmatpush1.msra.mxu0 0.0
        %500 = vmatprep.subr.mxu0 0.0
        %501 = vmatpush1.msra.mxu0 0.0
        %502 = vmatprep.subr.mxu0 0.0
        %503 = vmatpush1.msra.mxu0 0.0
        %504 = vmatprep.subr.mxu0 0.0
        %505 = vmatpush1.msra.mxu0 0.0
        %506 = vmatprep.subr.mxu0 0.0
        %507 = vmatpush1.msra.mxu0 0.0
        %508 = vmatprep.subr.mxu0 0.0
        %509 = vmatpush1.msra.mxu0 0.0
        %510 = vmatprep.subr.mxu0 0.0
        %511 = vmatpush1.msra.mxu0 0.0
        %512 = vmatprep.subr.mxu0 0.0
        %513 = vmatpush1.msra.mxu0 0.0
        %514 = vmatprep.subr.mxu0 0.0
        %515 = vmatpush1.msra.mxu0 0.0
        %516 = vmatprep.subr.mxu0 0.0
        %517 = vmatpush1.msra.mxu0 0.0
        %518 = vmatprep.subr.mxu0 0.0
        %519 = vmatpush1.msra.mxu0 %v493
        %520 = vmatprep.subr.mxu0 0.0
        %521 = vmatpush1.msra.mxu0 %v492
        %522 = vmatprep.subr.mxu0 0.0
        %523 = vmatpush1.msra.mxu0 %v491
        %524 = vmatprep.subr.mxu0 0.0
        %525 = vmatpush1.msra.mxu0 %v490
        %526 = vmatprep.subr.mxu0 0.0
        %527 = vmatpush2.msra.mxu0 0.0
        %528 = vmatprep.subr.mxu0 0.0
        %529 = vmatpush2.msra.mxu0 0.0
        %530 = vmatprep.subr.mxu0 0.0
        %531 = vmatpush2.msra.mxu0 0.0
        %532 = vmatprep.subr.mxu0 0.0
        %533 = vmatpush2.msra.mxu0 0.0
        %534 = vmatprep.subr.mxu0 0.0
        %535 = vmatpush2.msra.mxu0 0.0
        %536 = vmatprep.subr.mxu0 0.0
        %537 = vmatpush2.msra.mxu0 0.0
        %538 = vmatprep.subr.mxu0 0.0
        %539 = vmatpush2.msra.mxu0 0.0
        %540 = vmatprep.subr.mxu0 0.0
        %541 = vmatpush2.msra.mxu0 0.0
        %542 = vmatprep.subr.mxu0 0.0
        %543 = vmatpush2.msra.mxu0 0.0
        %544 = vmatprep.subr.mxu0 0.0
        %545 = vmatpush2.msra.mxu0 0.0
        %546 = vmatprep.subr.mxu0 0.0
        %547 = vmatpush2.msra.mxu0 0.0
        %548 = vmatprep.subr.mxu0 0.0
        %549 = vmatpush2.msra.mxu0 0.0
        %550 = vmatprep.subr.mxu0 0.0
        %551 = vmatpush2.msra.mxu0 0.0
        %552 = vmatprep.subr.mxu0 0.0
        %553 = vmatpush2.msra.mxu0 0.0
        %554 = vmatprep.subr.mxu0 0.0
        %555 = vmatpush2.msra.mxu0 0.0
        %556 = vmatprep.subr.mxu0 0.0
        %557 = vmatpush2.msra.mxu0 0.0
        %558 = vmatprep.mubr.f32.mxu0 0.0
        %559 = vmatmul.mubr.f32.gmra.mxu0 %v343
        %v560 = vpop.f32.mrf.mxu0
        %v561 = vadd.f32 0.0, %v560
        %v562 = vpop.f32.mrf.mxu0
        %563 = vdwg.mxu0
        %vm564 = vcmask 64512
        %v566 = vsel %vm564, %v415, 0
        %v569 = vsel %vm564, %v487, 0
        %571 = vmatprep.subr.mxu0 0.0
        %572 = vmatpush1.xpose.msra.mxu0 0.0
        %573 = vmatprep.subr.mxu0 0.0
        %574 = vmatpush1.xpose.msra.mxu0 0.0
        %575 = vmatprep.subr.mxu0 0.0
        %576 = vmatpush1.xpose.msra.mxu0 0.0
        %577 = vmatprep.subr.mxu0 0.0
        %578 = vmatpush1.xpose.msra.mxu0 0.0
        %579 = vmatprep.subr.mxu0 0.0
        %580 = vmatpush1.xpose.msra.mxu0 0.0
        %581 = vmatprep.subr.mxu0 0.0
        %582 = vmatpush1.xpose.msra.mxu0 0.0
        %583 = vmatprep.subr.mxu0 0.0
        %584 = vmatpush1.xpose.msra.mxu0 0.0
        %585 = vmatprep.subr.mxu0 0.0
        %586 = vmatpush1.xpose.msra.mxu0 0.0
        %587 = vmatprep.subr.mxu0 0.0
        %588 = vmatpush1.xpose.msra.mxu0 0.0
        %589 = vmatprep.subr.mxu0 0.0
        %590 = vmatpush1.xpose.msra.mxu0 0.0
        %591 = vmatprep.subr.mxu0 0.0
        %592 = vmatpush1.xpose.msra.mxu0 0.0
        %593 = vmatprep.subr.mxu0 0.0
        %594 = vmatpush1.xpose.msra.mxu0 0.0
        %595 = vmatprep.subr.mxu0 0.0
        %596 = vmatpush1.xpose.msra.mxu0 0.0
        %597 = vmatprep.subr.mxu0 0.0
        %598 = vmatpush1.xpose.msra.mxu0 0.0
        %599 = vmatprep.subr.mxu0 0.0
        %600 = vmatpush1.xpose.msra.mxu0 0.0
        %601 = vmatprep.subr.mxu0 0.0
        %602 = vmatpush1.xpose.msra.mxu0 %v569
        %603 = vmatprep.subr.mxu0 0.0
        %604 = vmatpush2.xpose.msra.mxu0 0.0
        %605 = vmatprep.subr.mxu0 0.0
        %606 = vmatpush2.xpose.msra.mxu0 0.0
        %607 = vmatprep.subr.mxu0 0.0
        %608 = vmatpush2.xpose.msra.mxu0 0.0
        %609 = vmatprep.subr.mxu0 0.0
        %610 = vmatpush2.xpose.msra.mxu0 0.0
        %611 = vmatprep.subr.mxu0 0.0
        %612 = vmatpush2.xpose.msra.mxu0 0.0
        %613 = vmatprep.subr.mxu0 0.0
        %614 = vmatpush2.xpose.msra.mxu0 0.0
        %615 = vmatprep.subr.mxu0 0.0
        %616 = vmatpush2.xpose.msra.mxu0 0.0
        %617 = vmatprep.subr.mxu0 0.0
        %618 = vmatpush2.xpose.msra.mxu0 0.0
        %619 = vmatprep.subr.mxu0 0.0
        %620 = vmatpush2.xpose.msra.mxu0 0.0
        %621 = vmatprep.subr.mxu0 0.0
        %622 = vmatpush2.xpose.msra.mxu0 0.0
        %623 = vmatprep.subr.mxu0 0.0
        %624 = vmatpush2.xpose.msra.mxu0 0.0
        %625 = vmatprep.subr.mxu0 0.0
        %626 = vmatpush2.xpose.msra.mxu0 0.0
        %627 = vmatprep.subr.mxu0 0.0
        %628 = vmatpush2.xpose.msra.mxu0 0.0
        %629 = vmatprep.subr.mxu0 0.0
        %630 = vmatpush2.xpose.msra.mxu0 0.0
        %631 = vmatprep.subr.mxu0 0.0
        %632 = vmatpush2.xpose.msra.mxu0 0.0
        %633 = vmatprep.subr.mxu0 0.0
        %634 = vmatpush2.xpose.msra.mxu0 0.0
        %635 = vmatprep.mubr.f32.mxu0 0.0
        %636 = vmatmul.mubr.f32.gmra.mxu0 %v566
        %v637 = vpop.f32.mrf.mxu0
        %v638 = vadd.f32 0.0, %v637
        %v639 = vpop.f32.mrf.mxu0
        %640 = vdwg.mxu0
        %v641 = vlaneseq
        %v642 = vshrl.u32 %v641, 7
        %v643 = vlaneseq
        %v644 = vand.u32 %v643, 127
        %vm645 = vcmp.gt.s32.totalorder %v644, %v642
        %v646 = vsel %vm645, -1e+30, %v638
        %v647 = vsel %vm564, %v646, -inf
        %648 = vmax.xlane.f32.xlu0 %v647
        %v649 = vpop.xlane.xlu0 %648
        %v650 = vsub.f32 %v646, %v649
        %v651 = vmul.f32 %v650, 1.442695
        %v652 = vpow.pop %v651
        %v653 = vsel %vm564, %v652, 0.0
        %654 = vadd.xlane.f32.xlu0 %v653
        %v655 = vpop.xlane.xlu0 %654
        %v656 = vrcp.pop %v655
        %v657 = vmul.f32 %v652, %v656
        %v659 = vsel %vm564, %v657, 0
        %661 = vmatprep.subr.mxu0 0.0
        %662 = vmatpush1.msra.mxu0 0.0
        %663 = vmatprep.subr.mxu0 0.0
        %664 = vmatpush1.msra.mxu0 0.0
        %665 = vmatprep.subr.mxu0 0.0
        %666 = vmatpush1.msra.mxu0 0.0
        %667 = vmatprep.subr.mxu0 0.0
        %668 = vmatpush1.msra.mxu0 0.0
        %669 = vmatprep.subr.mxu0 0.0
        %670 = vmatpush1.msra.mxu0 0.0
        %671 = vmatprep.subr.mxu0 0.0
        %672 = vmatpush1.msra.mxu0 0.0
        %673 = vmatprep.subr.mxu0 0.0
        %674 = vmatpush1.msra.mxu0 0.0
        %675 = vmatprep.subr.mxu0 0.0
        %676 = vmatpush1.msra.mxu0 0.0
        %677 = vmatprep.subr.mxu0 0.0
        %678 = vmatpush1.msra.mxu0 0.0
        %679 = vmatprep.subr.mxu0 0.0
        %680 = vmatpush1.msra.mxu0 0.0
        %681 = vmatprep.subr.mxu0 0.0
        %682 = vmatpush1.msra.mxu0 0.0
        %683 = vmatprep.subr.mxu0 0.0
        %684 = vmatpush1.msra.mxu0 0.0
        %685 = vmatprep.subr.mxu0 0.0
        %686 = vmatpush1.msra.mxu0 0.0
        %687 = vmatprep.subr.mxu0 0.0
        %688 = vmatpush1.msra.mxu0 0.0
        %689 = vmatprep.subr.mxu0 0.0
        %690 = vmatpush1.msra.mxu0 0.0
        %691 = vmatprep.subr.mxu0 0.0
        %692 = vmatpush1.msra.mxu0 %v561
        %693 = vmatprep.subr.mxu0 0.0
        %694 = vmatpush2.msra.mxu0 0.0
        %695 = vmatprep.subr.mxu0 0.0
        %696 = vmatpush2.msra.mxu0 0.0
        %697 = vmatprep.subr.mxu0 0.0
        %698 = vmatpush2.msra.mxu0 0.0
        %699 = vmatprep.subr.mxu0 0.0
        %700 = vmatpush2.msra.mxu0 0.0
        %701 = vmatprep.subr.mxu0 0.0
        %702 = vmatpush2.msra.mxu0 0.0
        %703 = vmatprep.subr.mxu0 0.0
        %704 = vmatpush2.msra.mxu0 0.0
        %705 = vmatprep.subr.mxu0 0.0
        %706 = vmatpush2.msra.mxu0 0.0
        %707 = vmatprep.subr.mxu0 0.0
        %708 = vmatpush2.msra.mxu0 0.0
        %709 = vmatprep.subr.mxu0 0.0
        %710 = vmatpush2.msra.mxu0 0.0
        %711 = vmatprep.subr.mxu0 0.0
        %712 = vmatpush2.msra.mxu0 0.0
        %713 = vmatprep.subr.mxu0 0.0
        %714 = vmatpush2.msra.mxu0 0.0
        %715 = vmatprep.subr.mxu0 0.0
        %716 = vmatpush2.msra.mxu0 0.0
        %717 = vmatprep.subr.mxu0 0.0
        %718 = vmatpush2.msra.mxu0 0.0
        %719 = vmatprep.subr.mxu0 0.0
        %720 = vmatpush2.msra.mxu0 0.0
        %721 = vmatprep.subr.mxu0 0.0
        %722 = vmatpush2.msra.mxu0 0.0
        %723 = vmatprep.subr.mxu0 0.0
        %724 = vmatpush2.msra.mxu0 0.0
        %725 = vmatprep.mubr.f32.mxu0 0.0
        %726 = vmatmul.mubr.f32.gmra.mxu0 %v659
        %v727 = vpop.f32.mrf.mxu0
        %v728 = vadd.f32 0.0, %v727
        %v729 = vpop.f32.mrf.mxu0
        %730 = vdwg.mxu0
        %v731 = vld [vmem:[%s335] sm:$0xff]
        %v733 = vsel %vm564, %v728, 0
        %735 = vmatprep.subr.mxu0 0.0
        %736 = vmatpush1.msra.mxu0 0.0
        %737 = vmatprep.subr.mxu0 0.0
        %738 = vmatpush1.msra.mxu0 0.0
        %739 = vmatprep.subr.mxu0 0.0
        %740 = vmatpush1.msra.mxu0 0.0
        %741 = vmatprep.subr.mxu0 0.0
        %742 = vmatpush1.msra.mxu0 0.0
        %743 = vmatprep.subr.mxu0 0.0
        %744 = vmatpush1.msra.mxu0 0.0
        %745 = vmatprep.subr.mxu0 0.0
        %746 = vmatpush1.msra.mxu0 0.0
        %747 = vmatprep.subr.mxu0 0.0
        %748 = vmatpush1.msra.mxu0 0.0
        %749 = vmatprep.subr.mxu0 0.0
        %750 = vmatpush1.msra.mxu0 0.0
        %751 = vmatprep.subr.mxu0 0.0
        %752 = vmatpush1.msra.mxu0 0.0
        %753 = vmatprep.subr.mxu0 0.0
        %754 = vmatpush1.msra.mxu0 0.0
        %755 = vmatprep.subr.mxu0 0.0
        %756 = vmatpush1.msra.mxu0 0.0
        %757 = vmatprep.subr.mxu0 0.0
        %758 = vmatpush1.msra.mxu0 0.0
        %759 = vmatprep.subr.mxu0 0.0
        %760 = vmatpush1.msra.mxu0 0.0
        %761 = vmatprep.subr.mxu0 0.0
        %762 = vmatpush1.msra.mxu0 0.0
        %763 = vmatprep.subr.mxu0 0.0
        %764 = vmatpush1.msra.mxu0 0.0
        %765 = vmatprep.subr.mxu0 0.0
        %766 = vmatpush1.msra.mxu0 %v731
        %767 = vmatprep.subr.mxu0 0.0
        %768 = vmatpush2.msra.mxu0 0.0
        %769 = vmatprep.subr.mxu0 0.0
        %770 = vmatpush2.msra.mxu0 0.0
        %771 = vmatprep.subr.mxu0 0.0
        %772 = vmatpush2.msra.mxu0 0.0
        %773 = vmatprep.subr.mxu0 0.0
        %774 = vmatpush2.msra.mxu0 0.0
        %775 = vmatprep.subr.mxu0 0.0
        %776 = vmatpush2.msra.mxu0 0.0
        %777 = vmatprep.subr.mxu0 0.0
        %778 = vmatpush2.msra.mxu0 0.0
        %779 = vmatprep.subr.mxu0 0.0
        %780 = vmatpush2.msra.mxu0 0.0
        %781 = vmatprep.subr.mxu0 0.0
        %782 = vmatpush2.msra.mxu0 0.0
        %783 = vmatprep.subr.mxu0 0.0
        %784 = vmatpush2.msra.mxu0 0.0
        %785 = vmatprep.subr.mxu0 0.0
        %786 = vmatpush2.msra.mxu0 0.0
        %787 = vmatprep.subr.mxu0 0.0
        %788 = vmatpush2.msra.mxu0 0.0
        %789 = vmatprep.subr.mxu0 0.0
        %790 = vmatpush2.msra.mxu0 0.0
        %791 = vmatprep.subr.mxu0 0.0
        %792 = vmatpush2.msra.mxu0 0.0
        %793 = vmatprep.subr.mxu0 0.0
        %794 = vmatpush2.msra.mxu0 0.0
        %795 = vmatprep.subr.mxu0 0.0
        %796 = vmatpush2.msra.mxu0 0.0
        %797 = vmatprep.subr.mxu0 0.0
        %798 = vmatpush2.msra.mxu0 0.0
        %799 = vmatprep.mubr.f32.mxu0 0.0
        %800 = vmatmul.mubr.f32.gmra.mxu0 %v733
        %v801 = vpop.f32.mrf.mxu0
        %v802 = vadd.f32 0.0, %v801
        %v803 = vpop.f32.mrf.mxu0
        %804 = vdwg.mxu0
        %p805 = scmp.eq.s32.totalorder %s25, 0
        // Predicated region
        $region45: #{tpu_custom_call.1} parent=43 // pred_check
          %p806 = pneg %p805
        $region46: #{tpu_custom_call.1} parent=43 // pred_check_branch
          %808 = sbr.rel (%p806) target = $region48
        $region47: #{tpu_custom_call.1} parent=43 // pred_region
          %809 = vst.msk [vmem:[#allocation2] sm:$0xff] %vm341, 0.0
        $region48: #{tpu_custom_call.1} parent=43 // pred_fallthru
          _
        %v810 = vld [vmem:[#allocation2] sm:$0xff]
        %v811 = vadd.f32 %v810, %v802
        %812 = vst.msk [vmem:[#allocation2] sm:$0xff] %vm341, %v811
        %p813 = scmp.eq.s32.totalorder %s25, 3
        // Predicated region
        $region49: #{tpu_custom_call.1} parent=43 // pred_check
          %p814 = pneg %p813
        $region50: #{tpu_custom_call.1} parent=43 // pred_check_branch
          %816 = sbr.rel (%p814) target = $region52
        $region51: #{tpu_custom_call.1} parent=43 // pred_region
          %v817 = vld [vmem:[#allocation2] sm:$0xff]
          %v818 = vld [vmem:[%s5] sm:$0x1]
          %v820 = vlaneseq
          %v821 = vshrl.u32 %v820, 7
          %v822 = vsub.s32 0, %v821
          %v823 = vrot.slane %v818, %v822
          %v825 = vadd.f32 %v817, %v823
          %826 = vst.msk [vmem:[%s312] sm:$0xff] %vm341, %v825
        $region52: #{tpu_custom_call.1} parent=43 // pred_fallthru
          _
        %s827 = sand.u32 %s191, 1
        %s828 = scalar_lea.sflag [#allocation4], %s827
        %s829 = sand.u32 %s191, 1
        %s830 = smul.addr %s829, 8
        %s831 = scalar_lea.vmem [#allocation3], %s830
        // Predicated region
        $region53: #{tpu_custom_call.1} parent=43 // pred_check
          %p832 = pneg %p201
        $region54: #{tpu_custom_call.1} parent=43 // pred_check_branch
          %834 = sbr.rel (%p832) target = $region56
        $region55: #{tpu_custom_call.1} parent=43 // pred_region
          %s836 = ssub.s32 128, 128
          %837 = vsyncadd %s828, %s836
          %s838 = smul.addr %s24, 128
          %s839 = scalar_lea.hbm %s6, %s838
          %s841 = sshll.u32 %s831, 4
          %s842 = int_to_ptr.vmem [resolvable:$true] %s841
          %844 = dma.vmem_to_hbm [thread:$0]  %s842, 128, %s839, %s828
        $region56: #{tpu_custom_call.1} parent=43 // pred_fallthru
          _
      $region44: #{tpu_custom_call.1} parent=5 // pred_fallthru
        _
      %p845 = scmp.le.s32.totalorder 2, %s15
      // Predicated region
      $region57: #{tpu_custom_call.1} parent=5 // pred_check
        %p846 = pneg %p845
      $region58: #{tpu_custom_call.1} parent=5 // pred_check_branch
        %848 = sbr.rel (%p846) target = $region60
      $region59: #{tpu_custom_call.1} parent=5 // pred_region
        %s849 = ssub.s32 %s15, 2
        // Predicated region
        $region61: #{tpu_custom_call.1} parent=59 // pred_check
          %p850 = pneg %p207
        $region62: #{tpu_custom_call.1} parent=59 // pred_check_branch
          %852 = sbr.rel (%p850) target = $region64
        $region63: #{tpu_custom_call.1} parent=59 // pred_region
          %s853 = sand.u32 %s192, 1
          %s854 = scalar_lea.sflag [#allocation4], %s853
          %s855 = sand.u32 %s192, 1
          %s856 = smul.addr %s855, 8
          %s857 = scalar_lea.vmem [#allocation3], %s856
          %858 = dma.done %s854, 128
        $region64: #{tpu_custom_call.1} parent=59 // pred_fallthru
          _
      $region60: #{tpu_custom_call.1} parent=5 // pred_fallthru
        _
    $region6: #{tpu_custom_call.1} parent=1 // loop_footer
      %s19 = sadd.s32 1, %s15
    $region7: #{tpu_custom_call.1} parent=1 // loop_footer_branch
      %14 = sbr.rel target = $region3
    $region8: #{tpu_custom_call.1} parent=1 // loop_exit
      _
    %859 = vsyncpa [#allocation4], 1
    %s860 = scalar_lea.sflag [#allocation4], 1
    %861 = vsyncpa %s860, 1

</llo_original>
